<compile_context>
chip_gen: v6e
topology: v6e:2x2x1
jax: 0.10.0
libtpu: 0.0.40
codegen_flags: <defaults>
</compile_context>

<pallas_src>
import functools

import jax
import jax.numpy as jnp
from jax.experimental import pallas as pl
from jax.experimental.pallas import tpu as pltpu


def classifier_kernel(x_ref, w_ref, b_ref, o_ref):
    """Fused: CLS linear + mean-pool over patch tokens + linear + residual, as ONE matmul.

    x_ref: (TB, N, D)     tokens (index 0 is CLS)
    w_ref: (2D, Cpad)     [W_cls ; W_vis] stacked along K, zero-padded columns
    b_ref: (1, Cpad)      b_cls + b_vis, zero-padded
    o_ref: (TB, Cpad)     padded output logits
    """
    n_tokens = x_ref.shape[1]
    x = x_ref[...].astype(jnp.float32)                  # (TB, N, D), accumulate in f32

    cls_tok = x[:, 0, :]                                # (TB, D)  aligned (offset 0)
    tok_sum = jnp.sum(x, axis=1)                        # (TB, D)  aligned sublane reduce
    pooled = (tok_sum - cls_tok) * (1.0 / (n_tokens - 1))

    lhs = jnp.concatenate([cls_tok, pooled], axis=-1)   # (TB, 2D)

    out = jnp.dot(lhs, w_ref[...], preferred_element_type=jnp.float32) + b_ref[...]
    o_ref[...] = out.astype(o_ref.dtype)


def _pick_batch_tile(B, N, D, bytes_per_elem, vmem_budget_bytes=8 * 1024 * 1024):
    """Largest batch tile whose double-buffered x slab fits the per-tile VMEM budget."""
    per_row = max(1, N * D * bytes_per_elem)
    tb = max(1, vmem_budget_bytes // (2 * per_row))
    tb = min(tb, B)
    if tb >= 8:
        tb = (tb // 8) * 8      # sublane-friendly
    return int(tb)


@functools.partial(jax.jit, static_argnames=())
def classifier_forward(x, w_cls, b_cls, w_vis, b_vis):
    """x: (B, N, D); weights pre-transposed to (D, C) (PyTorch stores (C, D)); biases (C,)."""
    B, N, D = x.shape
    C = w_cls.shape[1]

    # ---- wrapper-side prep: fuse the two linears into one (2D, Cpad) matmul ----
    C_pad = max(128, 128 * pl.cdiv(C, 128))             # lane-dense output width
    w_comb = jnp.concatenate([w_cls, w_vis], axis=0)     # (2D, C)
    w_comb = jnp.pad(w_comb, ((0, 0), (0, C_pad - C))).astype(jnp.float32)
    b_comb = jnp.pad(b_cls + b_vis, (0, C_pad - C)).reshape(1, C_pad).astype(jnp.float32)

    TB = _pick_batch_tile(B, N, D, x.dtype.itemsize)
    grid = (pl.cdiv(B, TB),)

    out_padded = pl.pallas_call(
        classifier_kernel,
        out_shape=jax.ShapeDtypeStruct((B, C_pad), x.dtype),
        grid=grid,
        in_specs=[
            pl.BlockSpec((TB, N, D), lambda i: (i, 0, 0)),        # x streams over batch
            pl.BlockSpec((2 * D, C_pad), lambda i: (0, 0)),       # weights: VMEM-resident
            pl.BlockSpec((1, C_pad), lambda i: (0, 0)),           # bias: VMEM-resident
        ],
        out_specs=pl.BlockSpec((TB, C_pad), lambda i: (i, 0)),
        compiler_params=pltpu.CompilerParams(
            dimension_semantics=("parallel",),
        ),
    )(x, w_comb, b_comb)

    return out_padded[:, :C]


def reference_forward(x, w_cls, b_cls, w_vis, b_vis):
    head = x[:, 0] @ w_cls + b_cls
    pooled = jnp.mean(x[:, 1:], axis=1)
    return pooled @ w_vis + b_vis + head


if __name__ == "__main__":
    # Small shapes consistent with the module: B=2 batch, N=9 tokens (1 CLS + 8 patches),
    # input_dim D=32, num_classes C=16.
    B, N, D, C = 2, 9, 32, 16

    key = jax.random.PRNGKey(0)
    kx, kwc, kbc, kwv, kbv = jax.random.split(key, 5)

    x = jax.random.normal(kx, (B, N, D), dtype=jnp.float32)
    # nn.Linear weights have shape (C, D) in PyTorch; store transposed (D, C) for the kernel.
    w_cls = jax.random.normal(kwc, (D, C), dtype=jnp.float32) * 0.02
    b_cls = jax.random.normal(kbc, (C,), dtype=jnp.float32) * 0.01
    w_vis = jax.random.normal(kwv, (D, C), dtype=jnp.float32) * 0.02
    b_vis = jax.random.normal(kbv, (C,), dtype=jnp.float32) * 0.01

    out = classifier_forward(x, w_cls, b_cls, w_vis, b_vis)
    out = jax.block_until_ready(out)

    ref = reference_forward(x, w_cls, b_cls, w_vis, b_vis)
    assert out.shape == (B, C), f"bad shape {out.shape}"
    assert jnp.allclose(out, ref, atol=1e-5, rtol=1e-5), "mismatch vs reference"

    print("KERNEL_OK")
</pallas_src>

<mosaic_0001>
module attributes {stable_mosaic.version = 11 : i64} {
  func.func @classifier_kernel(%arg0: i32, %arg1: memref<2x9x32xf32, #tpu.memory_space<vmem>>, %arg2: memref<64x128xf32, #tpu.memory_space<vmem>>, %arg3: memref<1x128xf32, #tpu.memory_space<vmem>>, %arg4: memref<2x128xf32, #tpu.memory_space<vmem>>) attributes {dimension_semantics = [#tpu.dimension_semantics<parallel>], iteration_bounds = array<i64: 1>, scalar_prefetch = 0 : i64, scratch_operands = 0 : i64, tpu.core_type = #tpu.core_type<tc>, window_params = [{transform_indices = @transform_0, window_bounds = array<i64: 2, 9, 32>}, {pipeline_mode = #tpu.pipeline_mode<synchronous>, transform_indices = @transform_1, window_bounds = array<i64: 64, 128>}, {pipeline_mode = #tpu.pipeline_mode<synchronous>, transform_indices = @transform_2, window_bounds = array<i64: 1, 128>}, {transform_indices = @transform_3, window_bounds = array<i64: 2, 128>}]} {
    %c0 = arith.constant 0 : index
    %c0_0 = arith.constant 0 : index
    %c0_1 = arith.constant 0 : index
    %0 = vector.load %arg1[%c0, %c0_0, %c0_1] : memref<2x9x32xf32, #tpu.memory_space<vmem>>, vector<2x9x32xf32>
    %1 = vector.extract_strided_slice %0 {offsets = [0, 0, 0], sizes = [2, 1, 32], strides = [1, 1, 1]} : vector<2x9x32xf32> to vector<2x1x32xf32>
    %2 = vector.shape_cast %1 : vector<2x1x32xf32> to vector<2x32xf32>
    %cst = arith.constant dense<0.000000e+00> : vector<2x32xf32>
    %3 = vector.multi_reduction <add>, %0, %cst [1] : vector<2x9x32xf32> to vector<2x32xf32>
    %4 = arith.subf %3, %2 : vector<2x32xf32>
    %cst_2 = arith.constant 1.250000e-01 : f32
    %5 = vector.broadcast %cst_2 : f32 to vector<2x32xf32>
    %6 = arith.mulf %4, %5 : vector<2x32xf32>
    %7 = tpu.concatenate %2, %6 in 1 : vector<2x32xf32>, vector<2x32xf32> -> vector<2x64xf32>
    %c0_3 = arith.constant 0 : index
    %c0_4 = arith.constant 0 : index
    %8 = vector.load %arg2[%c0_3, %c0_4] : memref<64x128xf32, #tpu.memory_space<vmem>>, vector<64x128xf32>
    %cst_5 = arith.constant dense<0.000000e+00> : vector<2x128xf32>
    %9 = tpu.matmul %7, %8, %cst_5 {dimension_numbers = #tpu.dot_dimension_numbers<[1], [0], [0], [1], [0, 0, 1, 1], [], []>} : vector<2x64xf32>, vector<64x128xf32>, vector<2x128xf32> -> vector<2x128xf32>
    %c0_6 = arith.constant 0 : index
    %c0_7 = arith.constant 0 : index
    %10 = vector.load %arg3[%c0_6, %c0_7] : memref<1x128xf32, #tpu.memory_space<vmem>>, vector<1x128xf32>
    %11 = vector.broadcast %10 : vector<1x128xf32> to vector<2x128xf32>
    %12 = arith.addf %9, %11 : vector<2x128xf32>
    %c0_8 = arith.constant 0 : index
    %c0_9 = arith.constant 0 : index
    %13 = vector.load %arg4[%c0_8, %c0_9] : memref<2x128xf32, #tpu.memory_space<vmem>>, vector<2x128xf32>
    tpu.vector_store %arg4[%c0_8, %c0_9], %12 {strides = array<i32>} : memref<2x128xf32, #tpu.memory_space<vmem>>, vector<2x128xf32>,
    return
  }
  func.func @transform_0(%arg0: i32) -> (i32, i32, i32) {
    %c0_i32 = arith.constant 0 : i32
    %c0_i32_0 = arith.constant 0 : i32
    %c0_i32_1 = arith.constant 0 : i32
    return %arg0, %c0_i32, %c0_i32_0 : i32, i32, i32
  }
  func.func @transform_1(%arg0: i32) -> (i32, i32) {
    %c0_i32 = arith.constant 0 : i32
    %c0_i32_0 = arith.constant 0 : i32
    %c0_i32_1 = arith.constant 0 : i32
    return %c0_i32, %c0_i32_0 : i32, i32
  }
  func.func @transform_2(%arg0: i32) -> (i32, i32) {
    %c0_i32 = arith.constant 0 : i32
    %c0_i32_0 = arith.constant 0 : i32
    %c0_i32_1 = arith.constant 0 : i32
    return %c0_i32, %c0_i32_0 : i32, i32
  }
  func.func @transform_3(%arg0: i32) -> (i32, i32) {
    %c0_i32 = arith.constant 0 : i32
    %c0_i32_0 = arith.constant 0 : i32
    return %arg0, %c0_i32 : i32, i32
  }
}

</mosaic_0001>

<llo_original>
// kernel: classifier_forward.1
$region0: #{classifier_forward.1}
  #allocation0 [shape = 'u32[]', space=smem, size = 0x4, offset = 0x4, fixed_abs, tag = 'smem constant byte address 0x4 - core index']
  #allocation1 [shape = 'u32[144,128]{1,0:T(1,128)}', space=vmem, size = 0x12000, scoped, tag = 'internal scratch']
  %s0 = inlined_call_operand.vmem [shape: f32[2,9,32], index: 0, kind: input, shape index: {}]
  %s1 = inlined_call_operand.vmem [shape: f32[64,128], index: 1, kind: input, shape index: {}]
  %s2 = inlined_call_operand.vmem [shape: f32[1,128], index: 2, kind: input, shape index: {}]
  %s3 = inlined_call_operand.hbm [shape: f32[2,128], index: 3, kind: output, shape index: {}]
  %s4 = sld [smem:[#allocation0]]
  $region22: #{classifier_forward.1} parent=0
    _
  %s6 = ssub.s32 1, %s4
  %s7 = scalar_select 0, %s6, %s4
  $region1: #{classifier_forward.1} parent=0
    #allocation2 [shape = 'u8[1024]{0}', space=vmem, size = 0x400, scoped, tag = 'output window, operand 0, single buffered']
    #allocation3 [shape = 's32[1]{0}', space=sflag, size = 0x4, scoped, tag = 'scoped memory for classifier_forward.1']
    %8 = vsyncpa [#allocation3], 0
    // Predicated region
    $region2: #{classifier_forward.1} parent=1 // pred_check
      _
    $region3: #{classifier_forward.1} parent=1 // pred_check_branch
      %10 = sbr.rel (0) target = $region5
    $region4: #{classifier_forward.1} parent=1 // pred_region
      _
    $region5: #{classifier_forward.1} parent=1 // pred_fallthru
      _
    // Predicated region
    $region6: #{classifier_forward.1} parent=1 // pred_check
      _
    $region7: #{classifier_forward.1} parent=1 // pred_check_branch
      %12 = sbr.rel (0) target = $region9
    $region8: #{classifier_forward.1} parent=1 // pred_region
      _
    $region9: #{classifier_forward.1} parent=1 // pred_fallthru
      _
    // Predicated region
    $region10: #{classifier_forward.1} parent=1 // pred_check
      _
    $region11: #{classifier_forward.1} parent=1 // pred_check_branch
      %14 = sbr.rel (0) target = $region13
    $region12: #{classifier_forward.1} parent=1 // pred_region
      _
    $region13: #{classifier_forward.1} parent=1 // pred_fallthru
      _
    %v15 = vld [vmem:[%s0] sm:$0xff]
    %v16 = vld [vmem:[%s0 + $0x8] sm:$0x1]
    %v17 = vld [vmem:[%s0 + $0x10] sm:$0xff]
    %v18 = vld [vmem:[%s0 + $0x18] sm:$0x1]
    %vm19 = vcmask 261120
    %v20 = vsel %vm19, %v15, 0.0
    %vm21 = vcmask 253952
    %v22 = vsel %vm21, %v16, 0.0
    %v23 = vadd.f32 %v20, %v22
    %v24 = vrot.slane %v23, 4
    %v25 = vadd.f32 %v23, %v24
    %v26 = vrot.slane %v25, 2
    %v27 = vadd.f32 %v25, %v26
    %v28 = vrot.slane %v27, 1
    %v29 = vadd.f32 %v27, %v28
    %v30 = vsel %vm19, %v17, 0.0
    %v31 = vsel %vm21, %v18, 0.0
    %v32 = vadd.f32 %v30, %v31
    %v33 = vrot.slane %v32, 4
    %v34 = vadd.f32 %v32, %v33
    %v35 = vrot.slane %v34, 2
    %v36 = vadd.f32 %v34, %v35
    %v37 = vrot.slane %v36, 1
    %v38 = vadd.f32 %v36, %v37
    %v39 = vsub.f32 %v29, %v15
    %v40 = vsub.f32 %v38, %v17
    %v41 = vmul.f32 %v39, 0.125
    %v42 = vmul.f32 %v40, 0.125
    %v45 = vrot.slane %v17, 7
    %vm46 = vcmask 1041409
    %v47 = vsel %vm46, %v45, %v15
    %v51 = vrot.slane %v42, 7
    %v52 = vsel %vm46, %v51, %v41
    %53 = vrot.lane.b32.xlu0 %v52, 32
    %v54 = vpop.permute.xlu0 %53
    %v56 = vsel %vm19, %v47, %v54
    %v57 = vld [vmem:[%s1] sm:$0xff]
    %v58 = vld [vmem:[%s1 + $0x8] sm:$0xff]
    %v59 = vld [vmem:[%s1 + $0x10] sm:$0xff]
    %v60 = vld [vmem:[%s1 + $0x18] sm:$0xff]
    %v61 = vld [vmem:[%s1 + $0x20] sm:$0xff]
    %v62 = vld [vmem:[%s1 + $0x28] sm:$0xff]
    %v63 = vld [vmem:[%s1 + $0x30] sm:$0xff]
    %v64 = vld [vmem:[%s1 + $0x38] sm:$0xff]
    %v65 = vld [vmem:[%s2] sm:$0x1]
    %v67 = vlaneseq
    %v68 = vshrl.u32 %v67, 7
    %v69 = vsub.s32 0, %v68
    %v70 = vrot.slane %v65, %v69
    %vm72 = vcmask 523264
    %v74 = vsel %vm72, %v56, 0
    %76 = vmatprep.subr.mxu0 0.0
    %77 = vmatpush1.msra.mxu0 0.0
    %78 = vmatprep.subr.mxu0 0.0
    %79 = vmatpush1.msra.mxu0 0.0
    %80 = vmatprep.subr.mxu0 0.0
    %81 = vmatpush1.msra.mxu0 0.0
    %82 = vmatprep.subr.mxu0 0.0
    %83 = vmatpush1.msra.mxu0 0.0
    %84 = vmatprep.subr.mxu0 0.0
    %85 = vmatpush1.msra.mxu0 0.0
    %86 = vmatprep.subr.mxu0 0.0
    %87 = vmatpush1.msra.mxu0 0.0
    %88 = vmatprep.subr.mxu0 0.0
    %89 = vmatpush1.msra.mxu0 0.0
    %90 = vmatprep.subr.mxu0 0.0
    %91 = vmatpush1.msra.mxu0 0.0
    %92 = vmatprep.subr.mxu0 0.0
    %93 = vmatpush1.msra.mxu0 %v64
    %94 = vmatprep.subr.mxu0 0.0
    %95 = vmatpush1.msra.mxu0 %v63
    %96 = vmatprep.subr.mxu0 0.0
    %97 = vmatpush1.msra.mxu0 %v62
    %98 = vmatprep.subr.mxu0 0.0
    %99 = vmatpush1.msra.mxu0 %v61
    %100 = vmatprep.subr.mxu0 0.0
    %101 = vmatpush1.msra.mxu0 %v60
    %102 = vmatprep.subr.mxu0 0.0
    %103 = vmatpush1.msra.mxu0 %v59
    %104 = vmatprep.subr.mxu0 0.0
    %105 = vmatpush1.msra.mxu0 %v58
    %106 = vmatprep.subr.mxu0 0.0
    %107 = vmatpush1.msra.mxu0 %v57
    %108 = vmatprep.subr.mxu0 0.0
    %109 = vmatpush2.msra.mxu0 0.0
    %110 = vmatprep.subr.mxu0 0.0
    %111 = vmatpush2.msra.mxu0 0.0
    %112 = vmatprep.subr.mxu0 0.0
    %113 = vmatpush2.msra.mxu0 0.0
    %114 = vmatprep.subr.mxu0 0.0
    %115 = vmatpush2.msra.mxu0 0.0
    %116 = vmatprep.subr.mxu0 0.0
    %117 = vmatpush2.msra.mxu0 0.0
    %118 = vmatprep.subr.mxu0 0.0
    %119 = vmatpush2.msra.mxu0 0.0
    %120 = vmatprep.subr.mxu0 0.0
    %121 = vmatpush2.msra.mxu0 0.0
    %122 = vmatprep.subr.mxu0 0.0
    %123 = vmatpush2.msra.mxu0 0.0
    %124 = vmatprep.subr.mxu0 0.0
    %125 = vmatpush2.msra.mxu0 0.0
    %126 = vmatprep.subr.mxu0 0.0
    %127 = vmatpush2.msra.mxu0 0.0
    %128 = vmatprep.subr.mxu0 0.0
    %129 = vmatpush2.msra.mxu0 0.0
    %130 = vmatprep.subr.mxu0 0.0
    %131 = vmatpush2.msra.mxu0 0.0
    %132 = vmatprep.subr.mxu0 0.0
    %133 = vmatpush2.msra.mxu0 0.0
    %134 = vmatprep.subr.mxu0 0.0
    %135 = vmatpush2.msra.mxu0 0.0
    %136 = vmatprep.subr.mxu0 0.0
    %137 = vmatpush2.msra.mxu0 0.0
    %138 = vmatprep.subr.mxu0 0.0
    %139 = vmatpush2.msra.mxu0 0.0
    %140 = vmatprep.mubr.f32.mxu0 0.0
    %141 = vmatmul.mubr.f32.gmra.mxu0 %v74
    %v142 = vpop.f32.mrf.mxu0
    %v143 = vadd.f32 %v70, %v142
    %v144 = vpop.f32.mrf.mxu0
    %145 = vdwg.mxu0
    %146 = vst [vmem:[#allocation2] sm:$0x3] %v143
    // Predicated region
    $region14: #{classifier_forward.1} parent=1 // pred_check
      _
    $region15: #{classifier_forward.1} parent=1 // pred_check_branch
      %148 = sbr.rel (0) target = $region17
    $region16: #{classifier_forward.1} parent=1 // pred_region
      %s150 = ssub.s32 32, 32
      %151 = vsyncadd [#allocation3], %s150
      %s153 = sshll.u32 [#allocation2], 4
      %s154 = int_to_ptr.vmem [resolvable:$true] %s153
      %156 = dma.vmem_to_hbm [thread:$0]  %s154, 32, %s3, [#allocation3]
    $region17: #{classifier_forward.1} parent=1 // pred_fallthru
      _
    // Predicated region
    $region18: #{classifier_forward.1} parent=1 // pred_check
      _
    $region19: #{classifier_forward.1} parent=1 // pred_check_branch
      %158 = sbr.rel (0) target = $region21
    $region20: #{classifier_forward.1} parent=1 // pred_region
      %159 = dma.done [#allocation3], 32
    $region21: #{classifier_forward.1} parent=1 // pred_fallthru
      _
    %160 = vsyncpa [#allocation3], 1

</llo_original>
